<compile_context>
chip_gen: v5e
topology: v5e:2x2
jax: 0.10.0
libtpu: 0.0.40
codegen_flags: <defaults>
</compile_context>

<pallas_src>
import math

import jax
import jax.numpy as jnp
from jax.experimental import pallas as pl
from jax.experimental.pallas import tpu as pltpu

# ----------------------------- model hyper-params -----------------------------
VOCAB = 50
VOCAB_PAD = 64            # padded vocab for an aligned one-hot MXU lookup
N = 2                     # batch
T = 8                     # sequence length
H = 32                    # hidden dim
NUM_HEADS = 2
HEAD_DIM = H // NUM_HEADS # dim_q = dim_k = dim_v
FF = 64                   # dim_feedforward
MAX_LEN = 43
LN_EPS = 1e-5
OUT_LANES = 128           # classifier output padded to a full lane vector
NT = N * T                # flattened rows
SROWS = NUM_HEADS * NT    # head-stacked rows for attention

SLAB_LANES = 128

# bf16 weight-slab row offsets (all multiples of 16 = bf16 sublane tile)
EMB_OFF = 0               # (VOCAB_PAD, H)
QKV_OFF = 64              # (H, 3*H)   columns = [Wq | Wk | Wv]
WO_OFF = 96               # (H, H)
W1_OFF = 128              # (H, FF)
W2_OFF = 160              # (FF, H)
WF_OFF = 224              # (H, OUT_LANES), lane 0 = real classifier weight
W_ROWS = 256

# f32 constant-slab row offsets (multiples of 8 = f32 sublane tile)
PE_OFF = 0                # (NT, H)
MASK_OFF = 16             # (SROWS, SROWS) additive block-diagonal mask
B1_OFF = 48               # (1, FF)
B2_OFF = 56               # (1, H)
C_ROWS = 64


def _layernorm(x):
    # PyTorch nn.LayerNorm over last axis, gamma=1, beta=0 (fresh, untrained).
    mean = jnp.mean(x, axis=-1, keepdims=True)
    var = jnp.mean((x - mean) ** 2, axis=-1, keepdims=True)
    return (x - mean) * jax.lax.rsqrt(var + LN_EPS)


# --------------------------------- the kernel ----------------------------------
def transformer_kernel(tok_ref, w_ref, c_ref, bf_ref, out_ref):
    # ---- embedding lookup as a one-hot matmul (MXU) + positional encoding -----
    tok = tok_ref[...]                                                  # (NT,1) i32
    vocab_ids = jax.lax.broadcasted_iota(jnp.int32, (NT, VOCAB_PAD), 1)
    onehot = (vocab_ids == tok).astype(jnp.bfloat16)                    # (NT, Vp)
    emb = w_ref[EMB_OFF:EMB_OFF + VOCAB_PAD, 0:H]                       # bf16
    x = jnp.dot(onehot, emb, preferred_element_type=jnp.float32)        # (NT, H)
    x = x * math.sqrt(float(H)) + c_ref[PE_OFF:PE_OFF + NT, 0:H]        # f32

    # ---- fused QKV projection: ONE MXU matmul --------------------------------
    xb = x.astype(jnp.bfloat16)
    w_qkv = w_ref[QKV_OFF:QKV_OFF + H, 0:3 * H]                         # (H, 3H)
    qkv = jnp.dot(xb, w_qkv, preferred_element_type=jnp.float32)        # (NT, 3H)

    # ---- stack heads along sublanes: (NUM_HEADS*NT, HEAD_DIM) -----------------
    q_s = jnp.concatenate(
        [qkv[:, h * HEAD_DIM:(h + 1) * HEAD_DIM] for h in range(NUM_HEADS)], axis=0)
    k_s = jnp.concatenate(
        [qkv[:, H + h * HEAD_DIM:H + (h + 1) * HEAD_DIM] for h in range(NUM_HEADS)],
        axis=0)
    v_s = jnp.concatenate(
        [qkv[:, 2 * H + h * HEAD_DIM:2 * H + (h + 1) * HEAD_DIM]
         for h in range(NUM_HEADS)], axis=0)                            # (SR, hd)

    # ---- one score matmul + precomputed additive block-diag mask + softmax ----
    inv_scale = 1.0 / math.sqrt(float(H))          # module scales by sqrt(dim=H)
    s = jax.lax.dot_general(q_s.astype(jnp.bfloat16), k_s.astype(jnp.bfloat16),
                            (((1,), (1,)), ((), ())),
                            preferred_element_type=jnp.float32)         # (SR, SR)
    s = s * inv_scale + c_ref[MASK_OFF:MASK_OFF + SROWS, 0:SROWS]
    s = s - jnp.max(s, axis=-1, keepdims=True)
    p = jnp.exp(s)
    p = p * pl.reciprocal(jnp.sum(p, axis=-1, keepdims=True), approx=True)

    # ---- one context matmul; de-stack heads (sublane slices); output proj -----
    ctx = jnp.dot(p.astype(jnp.bfloat16), v_s.astype(jnp.bfloat16),
                  preferred_element_type=jnp.float32)                   # (SR, hd)
    ctx_cat = jnp.concatenate(
        [ctx[h * NT:(h + 1) * NT, :] for h in range(NUM_HEADS)], axis=-1)  # (NT,H)
    wo = w_ref[WO_OFF:WO_OFF + H, 0:H]
    attn = jnp.dot(ctx_cat.astype(jnp.bfloat16), wo,
                   preferred_element_type=jnp.float32)                  # (NT, H)

    # ---- residual + layernorm #1 (f32 elementwise) -----------------------------
    y = _layernorm(x + attn)

    # ---- feed-forward (Linear -> ReLU -> Linear) -------------------------------
    w1 = w_ref[W1_OFF:W1_OFF + H, 0:FF]
    b1 = c_ref[B1_OFF:B1_OFF + 1, 0:FF]
    hdn = jnp.dot(y.astype(jnp.bfloat16), w1,
                  preferred_element_type=jnp.float32) + b1
    hdn = jnp.maximum(hdn, 0.0)
    w2 = w_ref[W2_OFF:W2_OFF + FF, 0:H]
    b2 = c_ref[B2_OFF:B2_OFF + 1, 0:H]
    ff = jnp.dot(hdn.astype(jnp.bfloat16), w2,
                 preferred_element_type=jnp.float32) + b2

    # ---- residual + layernorm #2 ------------------------------------------------
    y = _layernorm(y + ff)

    # ---- classifier: sigmoid(y @ Wf + bf), full 128-lane unmasked store ---------
    wf = w_ref[WF_OFF:WF_OFF + H, :]                                    # (H, 128)
    logit = jnp.dot(y.astype(jnp.bfloat16), wf,
                    preferred_element_type=jnp.float32) + bf_ref[0, 0]
    out_ref[...] = jax.nn.sigmoid(logit)                                # (NT, 128)


# ------------------------------- wrapper ---------------------------------------
def transformer_forward(tokens, kp):
    """tokens: (N, T) int32.  Returns sigmoid probabilities of shape (N, T, 1)."""
    n, t = tokens.shape
    nt = n * t
    tok_flat = tokens.reshape(nt, 1).astype(jnp.int32)

    vmem = pl.BlockSpec(memory_space=pltpu.MemorySpace.VMEM)
    smem = pl.BlockSpec(memory_space=pltpu.MemorySpace.SMEM)

    out = pl.pallas_call(
        transformer_kernel,
        out_shape=jax.ShapeDtypeStruct((nt, OUT_LANES), jnp.float32),
        in_specs=[vmem,    # token ids (NT, 1)
                  vmem,    # packed bf16 weight slab (256, 128)
                  vmem,    # packed f32 constant slab (64, 128)
                  smem],   # bf scalar (1, 1)
        out_specs=vmem,
    )(tok_flat, kp["w"], kp["c"], kp["bf"])

    return out[:, :1].reshape(n, t, 1)      # layout plumbing only


# ------------------------------- host-side prep --------------------------------
def make_positional_encoding(max_length, dim):
    position = jnp.arange(max_length, dtype=jnp.float32)[:, None]
    div_term = jnp.exp(jnp.arange(0, dim, 2, dtype=jnp.float32)
                       * (-math.log(10000.0) / dim))
    pe = jnp.zeros((max_length, dim), dtype=jnp.float32)
    pe = pe.at[:, 0::2].set(jnp.sin(position * div_term))
    pe = pe.at[:, 1::2].set(jnp.cos(position * div_term))
    return pe                                                  # (L, dim)


def init_params(key):
    def linear_w(k, fan_in, fan_out):
        bound = 1.0 / math.sqrt(fan_in)
        return jax.random.uniform(k, (fan_in, fan_out), jnp.float32, -bound, bound)

    def linear_b(k, fan_in, fan_out):
        bound = 1.0 / math.sqrt(fan_in)
        return jax.random.uniform(k, (1, fan_out), jnp.float32, -bound, bound)

    snap = lambda w: w.astype(jnp.bfloat16).astype(jnp.float32)

    ks = jax.random.split(key, 12)
    # Weights snapped to bf16-representable values (init-time choice only) so the
    # kernel's bf16 weight slab reproduces the reference's f32 weights exactly;
    # the only kernel/reference divergence is activation rounding + approx recip.
    return {
        "emb": snap(jax.random.normal(ks[0], (VOCAB, H), jnp.float32)),
        "wq": snap(linear_w(ks[1], H, H)),
        "wk": snap(linear_w(ks[2], H, HEAD_DIM * NUM_HEADS)),
        "wv": snap(linear_w(ks[3], H, HEAD_DIM * NUM_HEADS)),
        "wo": snap(linear_w(ks[4], HEAD_DIM * NUM_HEADS, H)),
        "w1": snap(linear_w(ks[5], H, FF)),
        "b1": linear_b(ks[6], H, FF),
        "w2": snap(linear_w(ks[7], FF, H)),
        "b2": linear_b(ks[8], FF, H),
        "wf": snap(linear_w(ks[9], H, 1)),
        "bf": linear_b(ks[10], H, 1),
    }


def prepare_kernel_params(params, pe, n, t):
    """One-time host-side packing of all constants into two (8,128)-aligned slabs."""
    nt = n * t
    srows = NUM_HEADS * nt

    # ---- bf16 weight slab -------------------------------------------------------
    w = jnp.zeros((W_ROWS, SLAB_LANES), jnp.float32)
    w = w.at[EMB_OFF:EMB_OFF + VOCAB, 0:H].set(params["emb"])
    w_qkv = jnp.concatenate([params["wq"], params["wk"], params["wv"]], axis=1)
    w = w.at[QKV_OFF:QKV_OFF + H, 0:3 * H].set(w_qkv)
    w = w.at[WO_OFF:WO_OFF + H, 0:H].set(params["wo"])
    w = w.at[W1_OFF:W1_OFF + H, 0:FF].set(params["w1"])
    w = w.at[W2_OFF:W2_OFF + FF, 0:H].set(params["w2"])
    w = w.at[WF_OFF:WF_OFF + H, 0].set(params["wf"][:, 0])
    w = w.astype(jnp.bfloat16)                      # lossless: weights bf16-snapped

    # ---- f32 constant slab ------------------------------------------------------
    c = jnp.zeros((C_ROWS, SLAB_LANES), jnp.float32)
    c = c.at[PE_OFF:PE_OFF + nt, 0:H].set(jnp.tile(pe[:t], (n, 1)))
    # Additive block-diagonal mask over the head-stacked (h, b, t) row layout:
    # rows attend iff same (head, batch) block of T consecutive rows.
    blk = jnp.arange(srows, dtype=jnp.int32) // t
    mask = jnp.where(blk[:, None] == blk[None, :], 0.0, -1e30).astype(jnp.float32)
    c = c.at[MASK_OFF:MASK_OFF + srows, 0:srows].set(mask)
    c = c.at[B1_OFF, 0:FF].set(params["b1"][0])
    c = c.at[B2_OFF, 0:H].set(params["b2"][0])

    return {"w": w, "c": c, "bf": params["bf"]}


# ------------------------------ pure-JAX reference ------------------------------
def reference_forward(tokens, p, pe):
    def ln(x):
        m = jnp.mean(x, -1, keepdims=True)
        v = jnp.mean((x - m) ** 2, -1, keepdims=True)
        return (x - m) / jnp.sqrt(v + LN_EPS)

    n, t = tokens.shape
    x = p["emb"][tokens] * math.sqrt(H) + pe[:t][None, :, :]
    q = (x @ p["wq"]).reshape(n, t, NUM_HEADS, HEAD_DIM)
    k = (x @ p["wk"]).reshape(n, t, NUM_HEADS, HEAD_DIM)
    v = (x @ p["wv"]).reshape(n, t, NUM_HEADS, HEAD_DIM)
    s = jnp.einsum("bqnd,bknd->bnqk", q, k) / math.sqrt(H)
    a = jax.nn.softmax(s, axis=-1)
    o = jnp.einsum("bnqk,bknd->bqnd", a, v).reshape(n, t, H) @ p["wo"]
    y = ln(x + o)
    ff = jnp.maximum(y @ p["w1"] + p["b1"][0], 0.0) @ p["w2"] + p["b2"][0]
    y = ln(y + ff)
    return jax.nn.sigmoid(y @ p["wf"] + p["bf"][0])


if __name__ == "__main__":
    key = jax.random.PRNGKey(0)
    k_tok, k_param = jax.random.split(key)

    tokens = jax.random.randint(k_tok, (N, T), 0, VOCAB, dtype=jnp.int32)
    params = init_params(k_param)
    pe = make_positional_encoding(MAX_LEN, H)
    kparams = prepare_kernel_params(params, pe, N, T)

    fwd = jax.jit(transformer_forward)
    out = jax.block_until_ready(fwd(tokens, kparams))

    with jax.default_matmul_precision("highest"):
        ref = jax.block_until_ready(reference_forward(tokens, params, pe))

    assert out.shape == (N, T, 1)
    # Tolerance covers the deliberate bf16 MXU operand casts (per perf review)
    # plus the approximate EUP reciprocal in the softmax.
    err = float(jnp.max(jnp.abs(out - ref)))
    assert err < 2e-2, f"mismatch vs JAX reference: max abs err = {err}"
    print("KERNEL_OK")
</pallas_src>

<mosaic_0001>
module attributes {stable_mosaic.version = 11 : i64} {
  func.func @transformer_kernel(%arg0: memref<16x1xi32, #tpu.memory_space<vmem>>, %arg1: memref<256x128xbf16, #tpu.memory_space<vmem>>, %arg2: memref<64x128xf32, #tpu.memory_space<vmem>>, %arg3: memref<1x1xf32, #tpu.memory_space<smem>>, %arg4: memref<16x128xf32, #tpu.memory_space<vmem>>) attributes {dimension_semantics = [], scalar_prefetch = 0 : i64, scratch_operands = 0 : i64, tpu.core_type = #tpu.core_type<tc>} {
    %c0 = arith.constant 0 : index
    %c0_0 = arith.constant 0 : index
    %0 = vector.load %arg0[%c0, %c0_0] : memref<16x1xi32, #tpu.memory_space<vmem>>, vector<16x1xi32>
    %1 = tpu.iota {dimensions = array<i32: 1>} : vector<16x64xi32>
    %2 = vector.broadcast %0 : vector<16x1xi32> to vector<16x64xi32>
    %3 = arith.cmpi eq, %1, %2 : vector<16x64xi32>
    %4 = arith.extui %3 : vector<16x64xi1> to vector<16x64xi32>
    %5 = arith.sitofp %4 : vector<16x64xi32> to vector<16x64xf32>
    %6 = arith.truncf %5 : vector<16x64xf32> to vector<16x64xbf16>
    %c0_1 = arith.constant 0 : index
    %c0_2 = arith.constant 0 : index
    %7 = vector.load %arg1[%c0_1, %c0_2] : memref<256x128xbf16, #tpu.memory_space<vmem>>, vector<64x32xbf16>
    %cst = arith.constant dense<0.000000e+00> : vector<16x32xf32>
    %8 = tpu.matmul %6, %7, %cst {dimension_numbers = #tpu.dot_dimension_numbers<[1], [0], [0], [1], [0, 0, 1, 1], [], []>} : vector<16x64xbf16>, vector<64x32xbf16>, vector<16x32xf32> -> vector<16x32xf32>
    %cst_3 = arith.constant 5.65685415 : f32
    %9 = vector.broadcast %cst_3 : f32 to vector<16x32xf32>
    %10 = arith.mulf %8, %9 : vector<16x32xf32>
    %c0_4 = arith.constant 0 : index
    %c0_5 = arith.constant 0 : index
    %11 = vector.load %arg2[%c0_4, %c0_5] : memref<64x128xf32, #tpu.memory_space<vmem>>, vector<16x32xf32>
    %12 = arith.addf %10, %11 : vector<16x32xf32>
    %13 = arith.truncf %12 : vector<16x32xf32> to vector<16x32xbf16>
    %c64 = arith.constant 64 : index
    %c0_6 = arith.constant 0 : index
    %14 = vector.load %arg1[%c64, %c0_6] : memref<256x128xbf16, #tpu.memory_space<vmem>>, vector<32x96xbf16>
    %cst_7 = arith.constant dense<0.000000e+00> : vector<16x96xf32>
    %15 = tpu.matmul %13, %14, %cst_7 {dimension_numbers = #tpu.dot_dimension_numbers<[1], [0], [0], [1], [0, 0, 1, 1], [], []>} : vector<16x32xbf16>, vector<32x96xbf16>, vector<16x96xf32> -> vector<16x96xf32>
    %16 = vector.extract_strided_slice %15 {offsets = [0, 0], sizes = [16, 16], strides = [1, 1]} : vector<16x96xf32> to vector<16x16xf32>
    %17 = vector.extract_strided_slice %15 {offsets = [0, 16], sizes = [16, 16], strides = [1, 1]} : vector<16x96xf32> to vector<16x16xf32>
    %18 = tpu.concatenate %16, %17 in 0 : vector<16x16xf32>, vector<16x16xf32> -> vector<32x16xf32>
    %19 = vector.extract_strided_slice %15 {offsets = [0, 32], sizes = [16, 16], strides = [1, 1]} : vector<16x96xf32> to vector<16x16xf32>
    %20 = vector.extract_strided_slice %15 {offsets = [0, 48], sizes = [16, 16], strides = [1, 1]} : vector<16x96xf32> to vector<16x16xf32>
    %21 = tpu.concatenate %19, %20 in 0 : vector<16x16xf32>, vector<16x16xf32> -> vector<32x16xf32>
    %22 = vector.extract_strided_slice %15 {offsets = [0, 64], sizes = [16, 16], strides = [1, 1]} : vector<16x96xf32> to vector<16x16xf32>
    %23 = vector.extract_strided_slice %15 {offsets = [0, 80], sizes = [16, 16], strides = [1, 1]} : vector<16x96xf32> to vector<16x16xf32>
    %24 = tpu.concatenate %22, %23 in 0 : vector<16x16xf32>, vector<16x16xf32> -> vector<32x16xf32>
    %25 = arith.truncf %18 : vector<32x16xf32> to vector<32x16xbf16>
    %26 = arith.truncf %21 : vector<32x16xf32> to vector<32x16xbf16>
    %cst_8 = arith.constant dense<0.000000e+00> : vector<32x32xf32>
    %27 = tpu.matmul %25, %26, %cst_8 {dimension_numbers = #tpu.dot_dimension_numbers<[1], [1], [0], [0], [0, 0, 1, 0], [], []>} : vector<32x16xbf16>, vector<32x16xbf16>, vector<32x32xf32> -> vector<32x32xf32>
    %cst_9 = arith.constant 0.176776692 : f32
    %28 = vector.broadcast %cst_9 : f32 to vector<32x32xf32>
    %29 = arith.mulf %27, %28 : vector<32x32xf32>
    %c16 = arith.constant 16 : index
    %c0_10 = arith.constant 0 : index
    %30 = vector.load %arg2[%c16, %c0_10] : memref<64x128xf32, #tpu.memory_space<vmem>>, vector<32x32xf32>
    %31 = arith.addf %29, %30 : vector<32x32xf32>
    %cst_11 = arith.constant dense<0xFF800000> : vector<32xf32>
    %32 = vector.multi_reduction <maximumf>, %31, %cst_11 [1] : vector<32x32xf32> to vector<32xf32>
    %33 = vector.shape_cast %32 : vector<32xf32> to vector<32x1xf32>
    %34 = vector.broadcast %33 : vector<32x1xf32> to vector<32x32xf32>
    %35 = arith.subf %31, %34 : vector<32x32xf32>
    %36 = math.exp %35 : vector<32x32xf32>
    %cst_12 = arith.constant dense<0.000000e+00> : vector<32xf32>
    %37 = vector.multi_reduction <add>, %36, %cst_12 [1] : vector<32x32xf32> to vector<32xf32>
    %38 = vector.shape_cast %37 : vector<32xf32> to vector<32x1xf32>
    %39 = tpu.reciprocal %38 {approx = true} : vector<32x1xf32> -> vector<32x1xf32>
    %40 = vector.broadcast %39 : vector<32x1xf32> to vector<32x32xf32>
    %41 = arith.mulf %36, %40 : vector<32x32xf32>
    %42 = arith.truncf %41 : vector<32x32xf32> to vector<32x32xbf16>
    %43 = arith.truncf %24 : vector<32x16xf32> to vector<32x16xbf16>
    %cst_13 = arith.constant dense<0.000000e+00> : vector<32x16xf32>
    %44 = tpu.matmul %42, %43, %cst_13 {dimension_numbers = #tpu.dot_dimension_numbers<[1], [0], [0], [1], [0, 0, 1, 1], [], []>} : vector<32x32xbf16>, vector<32x16xbf16>, vector<32x16xf32> -> vector<32x16xf32>
    %45 = vector.extract_strided_slice %44 {offsets = [0, 0], sizes = [16, 16], strides = [1, 1]} : vector<32x16xf32> to vector<16x16xf32>
    %46 = vector.extract_strided_slice %44 {offsets = [16, 0], sizes = [16, 16], strides = [1, 1]} : vector<32x16xf32> to vector<16x16xf32>
    %47 = tpu.concatenate %45, %46 in 1 : vector<16x16xf32>, vector<16x16xf32> -> vector<16x32xf32>
    %c96 = arith.constant 96 : index
    %c0_14 = arith.constant 0 : index
    %48 = vector.load %arg1[%c96, %c0_14] : memref<256x128xbf16, #tpu.memory_space<vmem>>, vector<32x32xbf16>
    %49 = arith.truncf %47 : vector<16x32xf32> to vector<16x32xbf16>
    %cst_15 = arith.constant dense<0.000000e+00> : vector<16x32xf32>
    %50 = tpu.matmul %49, %48, %cst_15 {dimension_numbers = #tpu.dot_dimension_numbers<[1], [0], [0], [1], [0, 0, 1, 1], [], []>} : vector<16x32xbf16>, vector<32x32xbf16>, vector<16x32xf32> -> vector<16x32xf32>
    %51 = arith.addf %12, %50 : vector<16x32xf32>
    %cst_16 = arith.constant dense<0.000000e+00> : vector<16xf32>
    %52 = vector.multi_reduction <add>, %51, %cst_16 [1] : vector<16x32xf32> to vector<16xf32>
    %53 = vector.shape_cast %52 : vector<16xf32> to vector<16x1xf32>
    %cst_17 = arith.constant 3.200000e+01 : f32
    %54 = vector.broadcast %cst_17 : f32 to vector<16x1xf32>
    %55 = arith.divf %53, %54 : vector<16x1xf32>
    %56 = vector.broadcast %55 : vector<16x1xf32> to vector<16x32xf32>
    %57 = arith.subf %51, %56 : vector<16x32xf32>
    %58 = arith.mulf %57, %57 : vector<16x32xf32>
    %cst_18 = arith.constant dense<0.000000e+00> : vector<16xf32>
    %59 = vector.multi_reduction <add>, %58, %cst_18 [1] : vector<16x32xf32> to vector<16xf32>
    %60 = vector.shape_cast %59 : vector<16xf32> to vector<16x1xf32>
    %cst_19 = arith.constant 3.200000e+01 : f32
    %61 = vector.broadcast %cst_19 : f32 to vector<16x1xf32>
    %62 = arith.divf %60, %61 : vector<16x1xf32>
    %63 = vector.broadcast %55 : vector<16x1xf32> to vector<16x32xf32>
    %64 = arith.subf %51, %63 : vector<16x32xf32>
    %cst_20 = arith.constant 9.99999974E-6 : f32
    %65 = vector.broadcast %cst_20 : f32 to vector<16x1xf32>
    %66 = arith.addf %62, %65 : vector<16x1xf32>
    %67 = math.rsqrt %66 : vector<16x1xf32>
    %68 = vector.broadcast %67 : vector<16x1xf32> to vector<16x32xf32>
    %69 = arith.mulf %64, %68 : vector<16x32xf32>
    %c128 = arith.constant 128 : index
    %c0_21 = arith.constant 0 : index
    %70 = vector.load %arg1[%c128, %c0_21] : memref<256x128xbf16, #tpu.memory_space<vmem>>, vector<32x64xbf16>
    %c48 = arith.constant 48 : index
    %c0_22 = arith.constant 0 : index
    %71 = vector.load %arg2[%c48, %c0_22] : memref<64x128xf32, #tpu.memory_space<vmem>>, vector<1x64xf32>
    %72 = arith.truncf %69 : vector<16x32xf32> to vector<16x32xbf16>
    %cst_23 = arith.constant dense<0.000000e+00> : vector<16x64xf32>
    %73 = tpu.matmul %72, %70, %cst_23 {dimension_numbers = #tpu.dot_dimension_numbers<[1], [0], [0], [1], [0, 0, 1, 1], [], []>} : vector<16x32xbf16>, vector<32x64xbf16>, vector<16x64xf32> -> vector<16x64xf32>
    %74 = vector.broadcast %71 : vector<1x64xf32> to vector<16x64xf32>
    %75 = arith.addf %73, %74 : vector<16x64xf32>
    %cst_24 = arith.constant 0.000000e+00 : f32
    %76 = vector.broadcast %cst_24 : f32 to vector<16x64xf32>
    %77 = arith.maximumf %75, %76 : vector<16x64xf32>
    %c160 = arith.constant 160 : index
    %c0_25 = arith.constant 0 : index
    %78 = vector.load %arg1[%c160, %c0_25] : memref<256x128xbf16, #tpu.memory_space<vmem>>, vector<64x32xbf16>
    %c56 = arith.constant 56 : index
    %c0_26 = arith.constant 0 : index
    %79 = vector.load %arg2[%c56, %c0_26] : memref<64x128xf32, #tpu.memory_space<vmem>>, vector<1x32xf32>
    %80 = arith.truncf %77 : vector<16x64xf32> to vector<16x64xbf16>
    %cst_27 = arith.constant dense<0.000000e+00> : vector<16x32xf32>
    %81 = tpu.matmul %80, %78, %cst_27 {dimension_numbers = #tpu.dot_dimension_numbers<[1], [0], [0], [1], [0, 0, 1, 1], [], []>} : vector<16x64xbf16>, vector<64x32xbf16>, vector<16x32xf32> -> vector<16x32xf32>
    %82 = vector.broadcast %79 : vector<1x32xf32> to vector<16x32xf32>
    %83 = arith.addf %81, %82 : vector<16x32xf32>
    %84 = arith.addf %69, %83 : vector<16x32xf32>
    %cst_28 = arith.constant dense<0.000000e+00> : vector<16xf32>
    %85 = vector.multi_reduction <add>, %84, %cst_28 [1] : vector<16x32xf32> to vector<16xf32>
    %86 = vector.shape_cast %85 : vector<16xf32> to vector<16x1xf32>
    %cst_29 = arith.constant 3.200000e+01 : f32
    %87 = vector.broadcast %cst_29 : f32 to vector<16x1xf32>
    %88 = arith.divf %86, %87 : vector<16x1xf32>
    %89 = vector.broadcast %88 : vector<16x1xf32> to vector<16x32xf32>
    %90 = arith.subf %84, %89 : vector<16x32xf32>
    %91 = arith.mulf %90, %90 : vector<16x32xf32>
    %cst_30 = arith.constant dense<0.000000e+00> : vector<16xf32>
    %92 = vector.multi_reduction <add>, %91, %cst_30 [1] : vector<16x32xf32> to vector<16xf32>
    %93 = vector.shape_cast %92 : vector<16xf32> to vector<16x1xf32>
    %cst_31 = arith.constant 3.200000e+01 : f32
    %94 = vector.broadcast %cst_31 : f32 to vector<16x1xf32>
    %95 = arith.divf %93, %94 : vector<16x1xf32>
    %96 = vector.broadcast %88 : vector<16x1xf32> to vector<16x32xf32>
    %97 = arith.subf %84, %96 : vector<16x32xf32>
    %cst_32 = arith.constant 9.99999974E-6 : f32
    %98 = vector.broadcast %cst_32 : f32 to vector<16x1xf32>
    %99 = arith.addf %95, %98 : vector<16x1xf32>
    %100 = math.rsqrt %99 : vector<16x1xf32>
    %101 = vector.broadcast %100 : vector<16x1xf32> to vector<16x32xf32>
    %102 = arith.mulf %97, %101 : vector<16x32xf32>
    %c224 = arith.constant 224 : index
    %c0_33 = arith.constant 0 : index
    %103 = vector.load %arg1[%c224, %c0_33] : memref<256x128xbf16, #tpu.memory_space<vmem>>, vector<32x128xbf16>
    %104 = arith.truncf %102 : vector<16x32xf32> to vector<16x32xbf16>
    %cst_34 = arith.constant dense<0.000000e+00> : vector<16x128xf32>
    %105 = tpu.matmul %104, %103, %cst_34 {dimension_numbers = #tpu.dot_dimension_numbers<[1], [0], [0], [1], [0, 0, 1, 1], [], []>} : vector<16x32xbf16>, vector<32x128xbf16>, vector<16x128xf32> -> vector<16x128xf32>
    %c0_35 = arith.constant 0 : index
    %c0_36 = arith.constant 0 : index
    %106 = memref.load %arg3[%c0_35, %c0_36] : memref<1x1xf32, #tpu.memory_space<smem>>
    %107 = vector.broadcast %106 : f32 to vector<16x128xf32>
    %108 = arith.addf %105, %107 : vector<16x128xf32>
    %109 = arith.negf %108 : vector<16x128xf32>
    %110 = math.exp %109 : vector<16x128xf32>
    %cst_37 = arith.constant 1.000000e+00 : f32
    %111 = vector.broadcast %cst_37 : f32 to vector<16x128xf32>
    %112 = arith.addf %111, %110 : vector<16x128xf32>
    %113 = arith.divf %111, %112 : vector<16x128xf32>
    %c0_38 = arith.constant 0 : index
    %c0_39 = arith.constant 0 : index
    %114 = vector.load %arg4[%c0_38, %c0_39] : memref<16x128xf32, #tpu.memory_space<vmem>>, vector<16x128xf32>
    tpu.vector_store %arg4[%c0_38, %c0_39], %113 {strides = array<i32>} : memref<16x128xf32, #tpu.memory_space<vmem>>, vector<16x128xf32>,
    return
  }
}

</mosaic_0001>

<llo_original>
// kernel: transformer_forward.1
$region0: #{transformer_forward.1}
  #allocation0 [shape = 'u32[]', space=smem, size = 0x4, offset = 0x4, fixed_abs, tag = 'smem constant byte address 0x4 - core index']
  #allocation1 [shape = 'u32[72,128]{1,0:T(1,128)}', space=vmem, size = 0x9000, scoped, tag = 'internal scratch']
  #allocation2 [shape = 'f32[1,1]{1,0:T(1,128)S(6)}', space=smem, size = 0x200, scoped, tag = 'scoped memory for transformer_forward.1']
  %s0 = inlined_call_operand.vmem [shape: s32[16,1], index: 0, kind: input, shape index: {}]
  %s1 = inlined_call_operand.hbm [shape: bf16[256,128], index: 1, kind: input, shape index: {}]
  %s2 = inlined_call_operand.hbm [shape: f32[64,128], index: 2, kind: input, shape index: {}]
  %s3 = inlined_call_operand.<no memory space> [shape: f32[1,1], index: 3, kind: input, shape index: {}]
  %s4 = inlined_call_operand.vmem [shape: f32[16,128], index: 4, kind: output, shape index: {}]
  %s5 = sld [smem:[#allocation0]]
  $region34: #{transformer_forward.1} parent=0
    _
  %s7 = ssub.s32 1, %s5
  %s8 = scalar_select 0, %s7, %s5
  %9 = sst [smem:[#allocation2]] %s3
  $region1: #{transformer_forward.1} parent=0
    #allocation3 [shape = 'u8[65536]{0}', space=vmem, size = 0x10000, scoped, tag = 'input window, operand 1, single buffered']
    #allocation4 [shape = 's32[1]{0}', space=sflag, size = 0x4, scoped, tag = 'scoped memory for transformer_forward.1']
    #allocation5 [shape = 'u8[32768]{0}', space=vmem, size = 0x8000, scoped, tag = 'input window, operand 2, single buffered']
    #allocation6 [shape = 's32[1]{0}', space=sflag, size = 0x4, scoped, tag = 'scoped memory for transformer_forward.1']
    %10 = vsyncpa [#allocation4], 0
    %11 = vsyncpa [#allocation6], 0
    // Predicated region
    $region2: #{transformer_forward.1} parent=1 // pred_check
      _
    $region3: #{transformer_forward.1} parent=1 // pred_check_branch
      %13 = sbr.rel (0) target = $region5
    $region4: #{transformer_forward.1} parent=1 // pred_region
      _
    $region5: #{transformer_forward.1} parent=1 // pred_fallthru
      _
    // Predicated region
    $region6: #{transformer_forward.1} parent=1 // pred_check
      _
    $region7: #{transformer_forward.1} parent=1 // pred_check_branch
      %15 = sbr.rel (0) target = $region9
    $region8: #{transformer_forward.1} parent=1 // pred_region
      %17 = vsyncadd [#allocation4], 0
      %s18 = sshll.u32 %s1, 4
      %s19 = int_to_ptr.hbm [resolvable:$true] %s18
      %s20 = sshll.u32 [#allocation3], 4
      %s21 = int_to_ptr.vmem [resolvable:$true] %s20
      %26 = dma.hbm_to_vmem [thread:$0]  %s19, 2048, %s21, [#allocation4], 64, 64, 4
    $region9: #{transformer_forward.1} parent=1 // pred_fallthru
      _
    // Predicated region
    $region10: #{transformer_forward.1} parent=1 // pred_check
      _
    $region11: #{transformer_forward.1} parent=1 // pred_check_branch
      %28 = sbr.rel (0) target = $region13
    $region12: #{transformer_forward.1} parent=1 // pred_region
      %30 = vsyncadd [#allocation6], 0
      %s31 = sshll.u32 %s2, 4
      %s32 = int_to_ptr.hbm [resolvable:$true] %s31
      %s33 = sshll.u32 [#allocation5], 4
      %s34 = int_to_ptr.vmem [resolvable:$true] %s33
      %39 = dma.hbm_to_vmem [thread:$0]  %s32, 1024, %s34, [#allocation6], 128, 128, 8
    $region13: #{transformer_forward.1} parent=1 // pred_fallthru
      _
    // Predicated region
    $region14: #{transformer_forward.1} parent=1 // pred_check
      _
    $region15: #{transformer_forward.1} parent=1 // pred_check_branch
      %41 = sbr.rel (0) target = $region17
    $region16: #{transformer_forward.1} parent=1 // pred_region
      _
    $region17: #{transformer_forward.1} parent=1 // pred_fallthru
      _
    // Predicated region
    $region18: #{transformer_forward.1} parent=1 // pred_check
      _
    $region19: #{transformer_forward.1} parent=1 // pred_check_branch
      %43 = sbr.rel (0) target = $region21
    $region20: #{transformer_forward.1} parent=1 // pred_region
      %45 = dma.done [#allocation4], 2048
    $region21: #{transformer_forward.1} parent=1 // pred_fallthru
      _
    // Predicated region
    $region22: #{transformer_forward.1} parent=1 // pred_check
      _
    $region23: #{transformer_forward.1} parent=1 // pred_check_branch
      %47 = sbr.rel (0) target = $region25
    $region24: #{transformer_forward.1} parent=1 // pred_region
      %49 = dma.done [#allocation6], 1024
    $region25: #{transformer_forward.1} parent=1 // pred_fallthru
      _
    %v51 = vld [vmem:[%s0] sm:$0xff]
    %v52 = vld [vmem:[%s0 + $0x8] sm:$0xff]
    %v53 = vlaneseq
    %v54 = vand.u32 %v53, 127
    %55 = vset.pattern.permute.xlu0 0
    %56 = vperm.xlu0 %55, %v51
    %v57 = vpop.permute.xlu0 %56
    %58 = vset.pattern.permute.xlu0 0
    %59 = vperm.xlu0 %58, %v52
    %v60 = vpop.permute.xlu0 %59
    %vm61 = vcmp.eq.s32.totalorder %v54, %v57
    %vm62 = vcmp.eq.s32.totalorder %v54, %v60
    %v63 = vsel %vm61, 1, 0
    %v64 = vsel %vm62, 1, 0
    %v65 = vcvt.s32.f32 %v63
    %v66 = vcvt.s32.f32 %v64
    %v67 = vpack.c.bf16 %v66, %v65
    %v68 = vld [vmem:[#allocation3] sm:$0xf]
    %v69 = vld [vmem:[#allocation3 + $0x4] sm:$0xf]
    %v70 = vld [vmem:[#allocation3 + $0x8] sm:$0xf]
    %v71 = vld [vmem:[#allocation3 + $0xc] sm:$0xf]
    %v72 = vld [vmem:[#allocation3 + $0x10] sm:$0xf]
    %v73 = vld [vmem:[#allocation3 + $0x14] sm:$0xf]
    %v74 = vld [vmem:[#allocation3 + $0x18] sm:$0xf]
    %v75 = vld [vmem:[#allocation3 + $0x1c] sm:$0xf]
    %v84 = vunpack.c.l.b16 %v68
    %v85 = vunpack.c.l.b16 %v69
    %v86 = vunpack.c.l.b16 %v70
    %v87 = vunpack.c.l.b16 %v71
    %v88 = vunpack.c.l.b16 %v72
    %v89 = vunpack.c.l.b16 %v73
    %v90 = vunpack.c.l.b16 %v74
    %v91 = vunpack.c.l.b16 %v75
    %v92 = vpack.c.b16 %v85, %v84
    %v93 = vpack.c.b16 %v87, %v86
    %v94 = vpack.c.b16 %v89, %v88
    %v95 = vpack.c.b16 %v91, %v90
    %vm100 = vcmask 523264
    %v102 = vsel %vm100, %v67, 0
    %104 = vmatpush.bf16.msra.mxu0 0
    %105 = vmatpush.bf16.msra.mxu0 0
    %106 = vmatpush.bf16.msra.mxu0 0
    %107 = vmatpush.bf16.msra.mxu0 0
    %108 = vmatpush.bf16.msra.mxu0 %v95
    %109 = vmatpush.bf16.msra.mxu0 %v94
    %110 = vmatpush.bf16.msra.mxu0 %v93
    %111 = vmatpush.bf16.msra.mxu0 %v92
    %112 = vmatmul.bf16.gmra.mxu0 %v102
    %v113 = vpop.f32.mrf.mxu0
    %v114 = vadd.f32 0.0, %v113
    %v115 = vpop.f32.mrf.mxu0
    %v116 = vadd.f32 0.0, %v115
    %117 = vdwg.mxu0
    %v118 = vmul.f32 %v114, 5.656854
    %v119 = vmul.f32 %v116, 5.656854
    %v120 = vld [vmem:[#allocation5] sm:$0xff]
    %v121 = vld [vmem:[#allocation5 + $0x8] sm:$0xff]
    %v122 = vadd.f32 %v118, %v120
    %v123 = vadd.f32 %v119, %v121
    %v124 = vpack.c.bf16 %v123, %v122
    %v125 = vld [vmem:[#allocation3 + $0x20] sm:$0xf]
    %v126 = vld [vmem:[#allocation3 + $0x24] sm:$0xf]
    %v127 = vld [vmem:[#allocation3 + $0x28] sm:$0xf]
    %v128 = vld [vmem:[#allocation3 + $0x2c] sm:$0xf]
    %v133 = vunpack.c.l.b16 %v125
    %v134 = vunpack.c.l.b16 %v126
    %v135 = vunpack.c.l.b16 %v127
    %v136 = vunpack.c.l.b16 %v128
    %v137 = vpack.c.b16 %v134, %v133
    %v138 = vpack.c.b16 %v136, %v135
    %vm141 = vcmask 261120
    %v143 = vsel %vm141, %v124, 0
    %145 = vmatpush.bf16.msra.mxu0 0
    %146 = vmatpush.bf16.msra.mxu0 0
    %147 = vmatpush.bf16.msra.mxu0 0
    %148 = vmatpush.bf16.msra.mxu0 0
    %149 = vmatpush.bf16.msra.mxu0 0
    %150 = vmatpush.bf16.msra.mxu0 0
    %151 = vmatpush.bf16.msra.mxu0 %v138
    %152 = vmatpush.bf16.msra.mxu0 %v137
    %153 = vmatmul.bf16.gmra.mxu0 %v143
    %v154 = vpop.f32.mrf.mxu0
    %v155 = vadd.f32 0.0, %v154
    %v156 = vpop.f32.mrf.mxu0
    %v157 = vadd.f32 0.0, %v156
    %158 = vdwg.mxu0
    %161 = vrot.lane.b32.xlu0 %v155, 112
    %v162 = vpop.permute.xlu0 %161
    %163 = vrot.lane.b32.xlu0 %v157, 112
    %v164 = vpop.permute.xlu0 %163
    %v167 = vpack.c.bf16 %v157, %v155
    %v168 = vpack.c.bf16 %v164, %v162
    %171 = vrot.lane.b32.xlu0 %v167, 96
    %v172 = vpop.permute.xlu0 %171
    %173 = vrot.lane.b32.xlu0 %v168, 96
    %v174 = vpop.permute.xlu0 %173
    %vm175 = vcmask 130048
    %v177 = vsel %vm175, %v167, 0
    %v180 = vsel %vm175, %v168, 0
    %v183 = vsel %vm175, %v172, 0
    %v186 = vsel %vm175, %v174, 0
    %188 = vmatpush.bf16.xpose.msra.mxu0 0
    %189 = vmatpush.bf16.xpose.msra.mxu0 0
    %190 = vmatpush.bf16.xpose.msra.mxu0 0
    %191 = vmatpush.bf16.xpose.msra.mxu0 0
    %192 = vmatpush.bf16.xpose.msra.mxu0 0
    %193 = vmatpush.bf16.xpose.msra.mxu0 0
    %194 = vmatpush.bf16.xpose.msra.mxu0 %v186
    %195 = vmatpush.bf16.xpose.msra.mxu0 %v183
    %196 = vmatmul.bf16.gmra.mxu0 %v177
    %v197 = vpop.f32.mrf.mxu0
    %v198 = vadd.f32 0.0, %v197
    %v199 = vpop.f32.mrf.mxu0
    %v200 = vadd.f32 0.0, %v199
    %201 = vmatmul.bf16.gmra.mxu0 %v180
    %v202 = vpop.f32.mrf.mxu0
    %v203 = vadd.f32 0.0, %v202
    %v204 = vpop.f32.mrf.mxu0
    %v205 = vadd.f32 0.0, %v204
    %206 = vdwg.mxu0
    %v207 = vmul.f32 %v198, 0.17677669
    %v208 = vmul.f32 %v200, 0.17677669
    %v209 = vmul.f32 %v203, 0.17677669
    %v210 = vmul.f32 %v205, 0.17677669
    %v211 = vld [vmem:[#allocation5 + $0x10] sm:$0xff]
    %v212 = vld [vmem:[#allocation5 + $0x18] sm:$0xff]
    %v213 = vld [vmem:[#allocation5 + $0x20] sm:$0xff]
    %v214 = vld [vmem:[#allocation5 + $0x28] sm:$0xff]
    %v215 = vadd.f32 %v207, %v211
    %v216 = vadd.f32 %v208, %v212
    %v217 = vadd.f32 %v209, %v213
    %v218 = vadd.f32 %v210, %v214
    %v219 = vsel %vm141, %v215, -inf
    %220 = vmax.xlane.f32.xlu0 %v219
    %v221 = vpop.xlane.xlu0 %220
    %v222 = vsel %vm141, %v216, -inf
    %223 = vmax.xlane.f32.xlu0 %v222
    %v224 = vpop.xlane.xlu0 %223
    %v225 = vsel %vm141, %v217, -inf
    %226 = vmax.xlane.f32.xlu0 %v225
    %v227 = vpop.xlane.xlu0 %226
    %v228 = vsel %vm141, %v218, -inf
    %229 = vmax.xlane.f32.xlu0 %v228
    %v230 = vpop.xlane.xlu0 %229
    %v231 = vsub.f32 %v215, %v221
    %v232 = vsub.f32 %v216, %v224
    %v233 = vsub.f32 %v217, %v227
    %v234 = vsub.f32 %v218, %v230
    %v235 = vmul.f32 %v231, 1.442695
    %v236 = vpow.pop %v235
    %v237 = vmul.f32 %v232, 1.442695
    %v238 = vpow.pop %v237
    %v239 = vmul.f32 %v233, 1.442695
    %v240 = vpow.pop %v239
    %v241 = vmul.f32 %v234, 1.442695
    %v242 = vpow.pop %v241
    %v243 = vsel %vm141, %v236, 0.0
    %244 = vadd.xlane.f32.xlu0 %v243
    %v245 = vpop.xlane.xlu0 %244
    %v246 = vsel %vm141, %v238, 0.0
    %247 = vadd.xlane.f32.xlu0 %v246
    %v248 = vpop.xlane.xlu0 %247
    %v249 = vsel %vm141, %v240, 0.0
    %250 = vadd.xlane.f32.xlu0 %v249
    %v251 = vpop.xlane.xlu0 %250
    %v252 = vsel %vm141, %v242, 0.0
    %253 = vadd.xlane.f32.xlu0 %v252
    %v254 = vpop.xlane.xlu0 %253
    %v255 = vrcp.pop %v245
    %v256 = vrcp.pop %v248
    %v257 = vrcp.pop %v251
    %v258 = vrcp.pop %v254
    %v259 = vmul.f32 %v236, %v255
    %v260 = vmul.f32 %v238, %v256
    %v261 = vmul.f32 %v240, %v257
    %v262 = vmul.f32 %v242, %v258
    %v263 = vpack.c.bf16 %v260, %v259
    %v264 = vpack.c.bf16 %v262, %v261
    %265 = vrot.lane.b32.xlu0 %v167, 64
    %v266 = vpop.permute.xlu0 %265
    %267 = vrot.lane.b32.xlu0 %v168, 64
    %v268 = vpop.permute.xlu0 %267
    %v272 = vsel %vm141, %v263, 0
    %v275 = vsel %vm141, %v264, 0
    %277 = vmatpush.bf16.msra.mxu0 0
    %278 = vmatpush.bf16.msra.mxu0 0
    %279 = vmatpush.bf16.msra.mxu0 0
    %280 = vmatpush.bf16.msra.mxu0 0
    %281 = vmatpush.bf16.msra.mxu0 0
    %282 = vmatpush.bf16.msra.mxu0 0
    %283 = vmatpush.bf16.msra.mxu0 %v268
    %284 = vmatpush.bf16.msra.mxu0 %v266
    %285 = vmatmul.bf16.gmra.mxu0 %v272
    %v286 = vpop.f32.mrf.mxu0
    %v287 = vadd.f32 0.0, %v286
    %v288 = vpop.f32.mrf.mxu0
    %v289 = vadd.f32 0.0, %v288
    %290 = vmatmul.bf16.gmra.mxu0 %v275
    %v291 = vpop.f32.mrf.mxu0
    %v292 = vadd.f32 0.0, %v291
    %v293 = vpop.f32.mrf.mxu0
    %v294 = vadd.f32 0.0, %v293
    %295 = vdwg.mxu0
    %298 = vrot.lane.b32.xlu0 %v292, 16
    %v299 = vpop.permute.xlu0 %298
    %300 = vrot.lane.b32.xlu0 %v294, 16
    %v301 = vpop.permute.xlu0 %300
    %v304 = vsel %vm175, %v287, %v299
    %v305 = vsel %vm175, %v289, %v301
    %v306 = vld [vmem:[#allocation3 + $0x30] sm:$0xf]
    %v307 = vld [vmem:[#allocation3 + $0x34] sm:$0xf]
    %v308 = vld [vmem:[#allocation3 + $0x38] sm:$0xf]
    %v309 = vld [vmem:[#allocation3 + $0x3c] sm:$0xf]
    %v310 = vpack.c.bf16 %v305, %v304
    %v315 = vunpack.c.l.b16 %v306
    %v316 = vunpack.c.l.b16 %v307
    %v317 = vunpack.c.l.b16 %v308
    %v318 = vunpack.c.l.b16 %v309
    %v319 = vpack.c.b16 %v316, %v315
    %v320 = vpack.c.b16 %v318, %v317
    %v324 = vsel %vm141, %v310, 0
    %326 = vmatpush.bf16.msra.mxu0 0
    %327 = vmatpush.bf16.msra.mxu0 0
    %328 = vmatpush.bf16.msra.mxu0 0
    %329 = vmatpush.bf16.msra.mxu0 0
    %330 = vmatpush.bf16.msra.mxu0 0
    %331 = vmatpush.bf16.msra.mxu0 0
    %332 = vmatpush.bf16.msra.mxu0 %v320
    %333 = vmatpush.bf16.msra.mxu0 %v319
    %334 = vmatmul.bf16.gmra.mxu0 %v324
    %v335 = vpop.f32.mrf.mxu0
    %v336 = vadd.f32 0.0, %v335
    %v337 = vpop.f32.mrf.mxu0
    %v338 = vadd.f32 0.0, %v337
    %339 = vdwg.mxu0
    %v340 = vadd.f32 %v122, %v336
    %v341 = vadd.f32 %v123, %v338
    %v342 = vsel %vm141, %v340, 0.0
    %343 = vadd.xlane.f32.xlu0 %v342
    %v344 = vpop.xlane.xlu0 %343
    %v345 = vsel %vm141, %v341, 0.0
    %346 = vadd.xlane.f32.xlu0 %v345
    %v347 = vpop.xlane.xlu0 %346
    %v348 = vrcp.pop 32.0
    %v349 = vmul.f32 32.0, %v348
    %v350 = vsub.f32 1.0, %v349
    %v351 = vmul.f32 %v348, %v350
    %v352 = vadd.f32 %v348, %v351
    %vm353 = vweird.f32 %v348
    %v354 = vsel %vm353, %v348, %v352
    %v355 = vmul.f32 %v344, %v354
    %v356 = vmul.f32 %v347, %v354
    %v357 = vsub.f32 %v340, %v355
    %v358 = vsub.f32 %v341, %v356
    %v359 = vmul.f32 %v357, %v357
    %v360 = vmul.f32 %v358, %v358
    %v361 = vsel %vm141, %v359, 0.0
    %362 = vadd.xlane.f32.xlu0 %v361
    %v363 = vpop.xlane.xlu0 %362
    %v364 = vsel %vm141, %v360, 0.0
    %365 = vadd.xlane.f32.xlu0 %v364
    %v366 = vpop.xlane.xlu0 %365
    %v367 = vmul.f32 %v363, %v354
    %v368 = vmul.f32 %v366, %v354
    %v369 = vadd.f32 %v367, 1e-05
    %v370 = vadd.f32 %v368, 1e-05
    %v371 = vrsqrt.pop %v369
    %v372 = vmul.f32 %v371, %v369
    %v373 = vmul.f32 %v372, %v371
    %v374 = vmul.f32 0.5, %v373
    %v375 = vsub.f32 1.5, %v374
    %v376 = vmul.f32 %v371, %v375
    %vm377 = vweird.f32 %v369
    %vm378 = vweird.f32 %v371
    %vm379 = vmor %vm377, %vm378
    %v380 = vsel %vm379, %v371, %v376
    %v381 = vrsqrt.pop %v370
    %v382 = vmul.f32 %v381, %v370
    %v383 = vmul.f32 %v382, %v381
    %v384 = vmul.f32 0.5, %v383
    %v385 = vsub.f32 1.5, %v384
    %v386 = vmul.f32 %v381, %v385
    %vm387 = vweird.f32 %v370
    %vm388 = vweird.f32 %v381
    %vm389 = vmor %vm387, %vm388
    %v390 = vsel %vm389, %v381, %v386
    %v391 = vmul.f32 %v357, %v380
    %v392 = vmul.f32 %v358, %v390
    %v393 = vld [vmem:[#allocation3 + $0x40] sm:$0xf]
    %v394 = vld [vmem:[#allocation3 + $0x44] sm:$0xf]
    %v395 = vld [vmem:[#allocation3 + $0x48] sm:$0xf]
    %v396 = vld [vmem:[#allocation3 + $0x4c] sm:$0xf]
    %v397 = vld [vmem:[#allocation5 + $0x30] sm:$0x1]
    %v398 = vpack.c.bf16 %v392, %v391
    %v399 = vperm.slane %v397, 0
    %v404 = vunpack.c.l.b16 %v393
    %v405 = vunpack.c.l.b16 %v394
    %v406 = vunpack.c.l.b16 %v395
    %v407 = vunpack.c.l.b16 %v396
    %v408 = vpack.c.b16 %v405, %v404
    %v409 = vpack.c.b16 %v407, %v406
    %v413 = vsel %vm141, %v398, 0
    %415 = vmatpush.bf16.msra.mxu0 0
    %416 = vmatpush.bf16.msra.mxu0 0
    %417 = vmatpush.bf16.msra.mxu0 0
    %418 = vmatpush.bf16.msra.mxu0 0
    %419 = vmatpush.bf16.msra.mxu0 0
    %420 = vmatpush.bf16.msra.mxu0 0
    %421 = vmatpush.bf16.msra.mxu0 %v409
    %422 = vmatpush.bf16.msra.mxu0 %v408
    %423 = vmatmul.bf16.gmra.mxu0 %v413
    %v424 = vpop.f32.mrf.mxu0
    %v425 = vadd.f32 %v399, %v424
    %v426 = vpop.f32.mrf.mxu0
    %v427 = vadd.f32 %v399, %v426
    %428 = vdwg.mxu0
    %v429 = vmax.f32 %v425, 0.0
    %v430 = vmax.f32 %v427, 0.0
    %v431 = vld [vmem:[#allocation3 + $0x50] sm:$0xf]
    %v432 = vld [vmem:[#allocation3 + $0x54] sm:$0xf]
    %v433 = vld [vmem:[#allocation3 + $0x58] sm:$0xf]
    %v434 = vld [vmem:[#allocation3 + $0x5c] sm:$0xf]
    %v435 = vld [vmem:[#allocation3 + $0x60] sm:$0xf]
    %v436 = vld [vmem:[#allocation3 + $0x64] sm:$0xf]
    %v437 = vld [vmem:[#allocation3 + $0x68] sm:$0xf]
    %v438 = vld [vmem:[#allocation3 + $0x6c] sm:$0xf]
    %v439 = vld [vmem:[#allocation5 + $0x38] sm:$0x1]
    %v440 = vpack.c.bf16 %v430, %v429
    %v441 = vperm.slane %v439, 0
    %v450 = vunpack.c.l.b16 %v431
    %v451 = vunpack.c.l.b16 %v432
    %v452 = vunpack.c.l.b16 %v433
    %v453 = vunpack.c.l.b16 %v434
    %v454 = vunpack.c.l.b16 %v435
    %v455 = vunpack.c.l.b16 %v436
    %v456 = vunpack.c.l.b16 %v437
    %v457 = vunpack.c.l.b16 %v438
    %v458 = vpack.c.b16 %v451, %v450
    %v459 = vpack.c.b16 %v453, %v452
    %v460 = vpack.c.b16 %v455, %v454
    %v461 = vpack.c.b16 %v457, %v456
    %v467 = vsel %vm100, %v440, 0
    %469 = vmatpush.bf16.msra.mxu0 0
    %470 = vmatpush.bf16.msra.mxu0 0
    %471 = vmatpush.bf16.msra.mxu0 0
    %472 = vmatpush.bf16.msra.mxu0 0
    %473 = vmatpush.bf16.msra.mxu0 %v461
    %474 = vmatpush.bf16.msra.mxu0 %v460
    %475 = vmatpush.bf16.msra.mxu0 %v459
    %476 = vmatpush.bf16.msra.mxu0 %v458
    %477 = vmatmul.bf16.gmra.mxu0 %v467
    %v478 = vpop.f32.mrf.mxu0
    %v479 = vadd.f32 %v441, %v478
    %v480 = vpop.f32.mrf.mxu0
    %v481 = vadd.f32 %v441, %v480
    %482 = vdwg.mxu0
    %v483 = vadd.f32 %v391, %v479
    %v484 = vadd.f32 %v392, %v481
    %v485 = vsel %vm141, %v483, 0.0
    %486 = vadd.xlane.f32.xlu0 %v485
    %v487 = vpop.xlane.xlu0 %486
    %v488 = vsel %vm141, %v484, 0.0
    %489 = vadd.xlane.f32.xlu0 %v488
    %v490 = vpop.xlane.xlu0 %489
    %v491 = vmul.f32 %v487, %v354
    %v492 = vmul.f32 %v490, %v354
    %v493 = vsub.f32 %v483, %v491
    %v494 = vsub.f32 %v484, %v492
    %v495 = vmul.f32 %v493, %v493
    %v496 = vmul.f32 %v494, %v494
    %v497 = vsel %vm141, %v495, 0.0
    %498 = vadd.xlane.f32.xlu0 %v497
    %v499 = vpop.xlane.xlu0 %498
    %v500 = vsel %vm141, %v496, 0.0
    %501 = vadd.xlane.f32.xlu0 %v500
    %v502 = vpop.xlane.xlu0 %501
    %v503 = vmul.f32 %v499, %v354
    %v504 = vmul.f32 %v502, %v354
    %v505 = vadd.f32 %v503, 1e-05
    %v506 = vadd.f32 %v504, 1e-05
    %v507 = vrsqrt.pop %v505
    %v508 = vmul.f32 %v507, %v505
    %v509 = vmul.f32 %v508, %v507
    %v510 = vmul.f32 0.5, %v509
    %v511 = vsub.f32 1.5, %v510
    %v512 = vmul.f32 %v507, %v511
    %vm513 = vweird.f32 %v505
    %vm514 = vweird.f32 %v507
    %vm515 = vmor %vm513, %vm514
    %v516 = vsel %vm515, %v507, %v512
    %v517 = vrsqrt.pop %v506
    %v518 = vmul.f32 %v517, %v506
    %v519 = vmul.f32 %v518, %v517
    %v520 = vmul.f32 0.5, %v519
    %v521 = vsub.f32 1.5, %v520
    %v522 = vmul.f32 %v517, %v521
    %vm523 = vweird.f32 %v506
    %vm524 = vweird.f32 %v517
    %vm525 = vmor %vm523, %vm524
    %v526 = vsel %vm525, %v517, %v522
    %v527 = vmul.f32 %v493, %v516
    %v528 = vmul.f32 %v494, %v526
    %v529 = vld [vmem:[#allocation3 + $0x70] sm:$0xf]
    %v530 = vld [vmem:[#allocation3 + $0x74] sm:$0xf]
    %v531 = vld [vmem:[#allocation3 + $0x78] sm:$0xf]
    %v532 = vld [vmem:[#allocation3 + $0x7c] sm:$0xf]
    %v533 = vpack.c.bf16 %v528, %v527
    %s534 = sld [smem:[#allocation2]]
    %v535 = vstv %s534
    %v540 = vunpack.c.l.b16 %v529
    %v541 = vunpack.c.l.b16 %v530
    %v542 = vunpack.c.l.b16 %v531
    %v543 = vunpack.c.l.b16 %v532
    %v544 = vpack.c.b16 %v541, %v540
    %v545 = vpack.c.b16 %v543, %v542
    %v549 = vsel %vm141, %v533, 0
    %551 = vmatpush.bf16.msra.mxu0 0
    %552 = vmatpush.bf16.msra.mxu0 0
    %553 = vmatpush.bf16.msra.mxu0 0
    %554 = vmatpush.bf16.msra.mxu0 0
    %555 = vmatpush.bf16.msra.mxu0 0
    %556 = vmatpush.bf16.msra.mxu0 0
    %557 = vmatpush.bf16.msra.mxu0 %v545
    %558 = vmatpush.bf16.msra.mxu0 %v544
    %559 = vmatmul.bf16.gmra.mxu0 %v549
    %v560 = vpop.f32.mrf.mxu0
    %v561 = vadd.f32 %v535, %v560
    %v562 = vpop.f32.mrf.mxu0
    %v563 = vadd.f32 %v535, %v562
    %564 = vdwg.mxu0
    %v565 = vxor.u32 %v561, 2147483648
    %v566 = vxor.u32 %v563, 2147483648
    %v567 = vmul.f32 %v565, 1.442695
    %v568 = vpow.pop %v567
    %v569 = vmul.f32 %v566, 1.442695
    %v570 = vpow.pop %v569
    %v571 = vadd.f32 %v568, 1.0
    %v572 = vadd.f32 %v570, 1.0
    %v573 = vrcp.pop %v571
    %v574 = vmul.f32 %v571, %v573
    %v575 = vsub.f32 1.0, %v574
    %v576 = vmul.f32 %v573, %v575
    %v577 = vadd.f32 %v573, %v576
    %vm578 = vweird.f32 %v571
    %vm579 = vweird.f32 %v573
    %vm580 = vmor %vm578, %vm579
    %v581 = vsel %vm580, %v573, %v577
    %v582 = vand.u32 2147483647, %v571
    %vm583 = vcmp.eq.f32.partialorder %v582, 8.507059e+37
    %v584 = vand.u32 %v571, 2147483648
    %v585 = vor.u32 1.1754944e-38, %v584
    %v586 = vsel %vm583, %v585, %v581
    %v587 = vmul.f32 1.0, %v586
    %v588 = vrcp.pop %v572
    %v589 = vmul.f32 %v572, %v588
    %v590 = vsub.f32 1.0, %v589
    %v591 = vmul.f32 %v588, %v590
    %v592 = vadd.f32 %v588, %v591
    %vm593 = vweird.f32 %v572
    %vm594 = vweird.f32 %v588
    %vm595 = vmor %vm593, %vm594
    %v596 = vsel %vm595, %v588, %v592
    %v597 = vand.u32 2147483647, %v572
    %vm598 = vcmp.eq.f32.partialorder %v597, 8.507059e+37
    %v599 = vand.u32 %v572, 2147483648
    %v600 = vor.u32 1.1754944e-38, %v599
    %v601 = vsel %vm598, %v600, %v596
    %v602 = vmul.f32 1.0, %v601
    %603 = vst [vmem:[%s4] sm:$0xff] %v587
    %604 = vst [vmem:[%s4 + $0x8] sm:$0xff] %v602
    // Predicated region
    $region26: #{transformer_forward.1} parent=1 // pred_check
      _
    $region27: #{transformer_forward.1} parent=1 // pred_check_branch
      %606 = sbr.rel (0) target = $region29
    $region28: #{transformer_forward.1} parent=1 // pred_region
      _
    $region29: #{transformer_forward.1} parent=1 // pred_fallthru
      _
    // Predicated region
    $region30: #{transformer_forward.1} parent=1 // pred_check
      _
    $region31: #{transformer_forward.1} parent=1 // pred_check_branch
      %608 = sbr.rel (0) target = $region33
    $region32: #{transformer_forward.1} parent=1 // pred_region
      _
    $region33: #{transformer_forward.1} parent=1 // pred_fallthru
      _
    %609 = vsyncpa [#allocation4], 1
    %610 = vsyncpa [#allocation6], 1

</llo_original>
